<compile_context>
chip_gen: v7x
topology: tpu7x:2x2x1
jax: 0.10.0
libtpu: 0.0.40
codegen_flags: <defaults>
</compile_context>

<pallas_src>
import jax
import jax.numpy as jnp
import numpy as np
from jax.experimental import pallas as pl
from jax.experimental.pallas import tpu as pltpu


# -------------------- helpers --------------------

def _round_up(x, m):
    return ((x + m - 1) // m) * m


def _pad_2d(a, rows, cols):
    r, c = a.shape
    return jnp.pad(a, ((0, rows - r), (0, cols - c)))


def _device_kind():
    try:
        return jax.devices()[0].device_kind.lower()
    except Exception:
        return ""


def _num_tensorcores():
    # v7x has 2 TensorCores per chip; v5e / v6e have 1.
    kind = _device_kind()
    return 2 if ("v7" in kind or "7x" in kind) else 1


def _default_fuse_mid():
    # Fusing root_w2 @ box_w1 is free in MXU passes on the 256-wide MXU of
    # v6e/v7x but costs ~25% more passes on the 128-wide MXU of v5e and older.
    kind = _device_kind()
    if any(s in kind for s in ("v2", "v3", "v4", "v5")):
        return False
    return True


def _pick_bm(B, block_rows):
    # Row block: multiple of 16 (bf16 sublane packing), as large as allowed so
    # per-grid-step overhead amortizes.
    bm = _round_up(min(block_rows, max(B, 16)), 16)
    ncores = _num_tensorcores()
    if ncores > 1 and B > 16 * ncores:
        # Keep >= ncores grid steps so the "parallel" batch axis can shard
        # row blocks across both v7x TensorCores.
        bm = min(bm, _round_up(pl.cdiv(B, ncores), 16))
    return min(bm, 4096)


# -------------------- kernels --------------------

def _full_dec_kernel_fused(x_ref, w1_ref, b1_ref, w2_ref, b2_ref, w3_ref, b3_ref,
                           out_ref):
    """FullDec row block, 3 matmuls (root_w2 @ box_w1 pre-fused into w2)."""
    cdt = w1_ref.dtype                       # MXU operand dtype (bf16 or f32)
    x = x_ref[...].astype(cdt)
    h = jnp.dot(x, w1_ref[...], preferred_element_type=jnp.float32) + b1_ref[...]
    h = jnp.maximum(h, 0.0)
    h = jnp.dot(h.astype(cdt), w2_ref[...],
                preferred_element_type=jnp.float32) + b2_ref[...]
    h = jnp.maximum(h, 0.0)
    out_ref[...] = (jnp.dot(h.astype(cdt), w3_ref[...],
                            preferred_element_type=jnp.float32)
                    + b3_ref[...]).astype(out_ref.dtype)


def _full_dec_kernel_unfused(x_ref, w1_ref, b1_ref, rw2_ref, rb2_ref,
                             bw1_ref, bb1_ref, w3_ref, b3_ref, out_ref):
    """FullDec row block, 4 matmuls (layer-by-layer, used on v5e)."""
    cdt = w1_ref.dtype
    x = x_ref[...].astype(cdt)
    h1 = jnp.dot(x, w1_ref[...], preferred_element_type=jnp.float32) + b1_ref[...]
    h1 = jnp.maximum(h1, 0.0)
    box = jnp.dot(h1.astype(cdt), rw2_ref[...],
                  preferred_element_type=jnp.float32) + rb2_ref[...]
    h2 = jnp.dot(box.astype(cdt), bw1_ref[...],
                 preferred_element_type=jnp.float32) + bb1_ref[...]
    h2 = jnp.maximum(h2, 0.0)
    out_ref[...] = (jnp.dot(h2.astype(cdt), w3_ref[...],
                            preferred_element_type=jnp.float32)
                    + b3_ref[...]).astype(out_ref.dtype)


# -------------------- parameter prep --------------------

def prepare_params(raw, weight_dtype=jnp.bfloat16, fuse_mid=None):
    """Pad feature dims to lane multiples, optionally fuse the middle linear
    pair, and cast weights ONCE (not per call). Biases stay f32."""
    if fuse_mid is None:
        fuse_mid = _default_fuse_mid()

    d, h = raw["root_w1"].shape
    k = raw["box_w2"].shape[1]
    dp = _round_up(d, 128)
    hp = _round_up(h, 128)
    kp = _round_up(k, 128)
    f32 = jnp.float32

    def wpad(a, rows, cols):
        return _pad_2d(a.astype(f32), rows, cols).astype(weight_dtype)

    def bpad(a, cols):
        return _pad_2d(a.astype(f32), 1, cols)

    params = dict(d=d, h=h, k=k, dp=dp, hp=hp, kp=kp,
                  weight_dtype=weight_dtype, fuse_mid=fuse_mid)

    # Layer 1 keeps its contraction dim at d=100 (matches unpadded x blocks;
    # Mosaic pads/masks the contraction internally).
    params["w1"] = wpad(raw["root_w1"], d, hp)
    params["b1"] = bpad(raw["root_b1"], hp)
    params["w3"] = wpad(raw["box_w2"], hp, kp)
    params["b3"] = bpad(raw["box_b2"], kp)

    if fuse_mid:
        # Exact (no nonlinearity between the two linears), computed in f32.
        wmid = jnp.dot(raw["root_w2"], raw["box_w1"],
                       preferred_element_type=f32)                       # (h, h)
        bmid = jnp.dot(raw["root_b2"], raw["box_w1"],
                       preferred_element_type=f32) + raw["box_b1"]       # (1, h)
        params["w2"] = wpad(wmid, hp, hp)
        params["b2"] = bpad(bmid, hp)
    else:
        params["rw2"] = wpad(raw["root_w2"], hp, dp)
        params["rb2"] = bpad(raw["root_b2"], dp)
        params["bw1"] = wpad(raw["box_w1"], dp, hp)
        params["bb1"] = bpad(raw["box_b1"], hp)
    return params


# -------------------- wrapper --------------------

def full_dec(params, d_vec, *, block_rows=2048, out_dtype=jnp.float32):
    """Pallas implementation of FullDec.forward for a [B, d] batch -> [B, k]."""
    B, d = d_vec.shape
    assert d == params["d"], f"expected d={params['d']}, got {d}"
    kp, k = params["kp"], params["k"]

    bm = _pick_bm(B, block_rows)
    grid = (pl.cdiv(B, bm),)        # ragged last row block handled by Pallas

    if params["fuse_mid"]:
        kernel = _full_dec_kernel_fused
        weights = (params["w1"], params["b1"], params["w2"], params["b2"],
                   params["w3"], params["b3"])
    else:
        kernel = _full_dec_kernel_unfused
        weights = (params["w1"], params["b1"],
                   params["rw2"], params["rb2"], params["bw1"], params["bb1"],
                   params["w3"], params["b3"])

    # Constant index_maps -> weights DMA'd to VMEM once, resident across steps.
    resident = lambda arr: pl.BlockSpec(arr.shape, lambda i: (0, 0))
    in_specs = ([pl.BlockSpec((bm, d), lambda i: (i, 0))]
                + [resident(w) for w in weights])
    out_specs = pl.BlockSpec((bm, kp), lambda i: (i, 0))

    out = pl.pallas_call(
        kernel,
        grid=grid,
        in_specs=in_specs,
        out_specs=out_specs,
        out_shape=jax.ShapeDtypeStruct((B, kp), out_dtype),
        compiler_params=pltpu.CompilerParams(
            dimension_semantics=("parallel",),
            vmem_limit_bytes=48 * 1024 * 1024,
        ),
    )(d_vec, *weights)

    # Columns [k:kp] are exact zeros (zero-padded weights/biases); slice off.
    return out[:, :k]


# -------------------- parameter init (deterministic, synthetic) --------------------

def init_raw_params(key, k=55, d=100, h=300):
    ks = jax.random.split(key, 8)

    def lin(kw, kb, fan_in, fan_out):
        # PyTorch nn.Linear-style uniform init, weight stored as [in, out]
        bound = 1.0 / np.sqrt(fan_in)
        w = jax.random.uniform(kw, (fan_in, fan_out), jnp.float32, -bound, bound)
        b = jax.random.uniform(kb, (1, fan_out), jnp.float32, -bound, bound)
        return w, b

    root_w1, root_b1 = lin(ks[0], ks[1], d, h)
    root_w2, root_b2 = lin(ks[2], ks[3], h, d)
    box_w1, box_b1 = lin(ks[4], ks[5], d, h)
    box_w2, box_b2 = lin(ks[6], ks[7], h, k)
    # TODO(synk): cat_root_to_leaf_dec (Linear(7d,h)+ReLU+Linear(h,d)) is a
    # member of FullDec but unused by forward(); not implemented here.
    return dict(root_w1=root_w1, root_b1=root_b1, root_w2=root_w2, root_b2=root_b2,
                box_w1=box_w1, box_b1=box_b1, box_w2=box_w2, box_b2=box_b2)


# -------------------- pure-JAX reference (mirrors kernel dtype casts / fusion) ---------

def reference(raw, d_vec, weight_dtype=jnp.float32, fuse_mid=False):
    f32 = jnp.float32
    c = lambda a: a.astype(weight_dtype)

    def lin(x, w, b):
        return jnp.dot(c(x), c(w), preferred_element_type=f32) + b.astype(f32)

    if fuse_mid:
        wmid = jnp.dot(raw["root_w2"], raw["box_w1"], preferred_element_type=f32)
        bmid = jnp.dot(raw["root_b2"], raw["box_w1"],
                       preferred_element_type=f32) + raw["box_b1"]
        x = jnp.maximum(lin(d_vec, raw["root_w1"], raw["root_b1"]), 0.0)
        x = jnp.maximum(lin(x, wmid, bmid), 0.0)
        return lin(x, raw["box_w2"], raw["box_b2"])
    else:
        x = jnp.maximum(lin(d_vec, raw["root_w1"], raw["root_b1"]), 0.0)
        box = lin(x, raw["root_w2"], raw["root_b2"])
        x = jnp.maximum(lin(box, raw["box_w1"], raw["box_b1"]), 0.0)
        return lin(x, raw["box_w2"], raw["box_b2"])


# -------------------- main --------------------

if __name__ == "__main__":
    B, k, d, h = 16, 55, 100, 300   # FullDec defaults (k=55, d=100, h=300), small batch
    key = jax.random.PRNGKey(0)
    kparam, kx = jax.random.split(key)

    raw = init_raw_params(kparam, k=k, d=d, h=h)
    d_vec = jax.random.normal(kx, (B, d), jnp.float32)

    # 1) f32 weights, layer-by-layer (4 matmuls) -- strict check.
    p_f32 = prepare_params(raw, weight_dtype=jnp.float32, fuse_mid=False)
    out = full_dec(p_f32, d_vec)
    jax.block_until_ready(out)
    assert out.shape == (B, k)
    np.testing.assert_allclose(
        np.asarray(out),
        np.asarray(reference(raw, d_vec, jnp.float32, fuse_mid=False)),
        rtol=1e-4, atol=1e-4)

    # 2) f32 weights, fused middle pair (3 matmuls) -- strict check.
    p_fuse = prepare_params(raw, weight_dtype=jnp.float32, fuse_mid=True)
    out = full_dec(p_fuse, d_vec)
    jax.block_until_ready(out)
    np.testing.assert_allclose(
        np.asarray(out),
        np.asarray(reference(raw, d_vec, jnp.float32, fuse_mid=True)),
        rtol=1e-4, atol=1e-4)

    # 3) Default perf config: bf16 operands (f32 accumulation), fusion auto-detected.
    p_def = prepare_params(raw)
    out = full_dec(p_def, d_vec)
    jax.block_until_ready(out)
    np.testing.assert_allclose(
        np.asarray(out),
        np.asarray(reference(raw, d_vec, jnp.bfloat16, fuse_mid=p_def["fuse_mid"])),
        rtol=2e-2, atol=2e-2)

    # 4) Multi-step grid with a ragged last row block (B not a multiple of bm).
    B2 = 40
    d_vec2 = jax.random.normal(jax.random.PRNGKey(2), (B2, d), jnp.float32)
    out2 = full_dec(p_def, d_vec2, block_rows=16)   # grid = cdiv(40, 16) = 3
    jax.block_until_ready(out2)
    assert out2.shape == (B2, k)
    np.testing.assert_allclose(
        np.asarray(out2),
        np.asarray(reference(raw, d_vec2, jnp.bfloat16, fuse_mid=p_def["fuse_mid"])),
        rtol=2e-2, atol=2e-2)

    print("KERNEL_OK")
</pallas_src>

<mosaic_0001>
module attributes {stable_mosaic.version = 11 : i64} {
  func.func @_full_dec_kernel_unfused(%arg0: i32, %arg1: memref<16x100xf32, #tpu.memory_space<vmem>>, %arg2: memref<100x384xf32, #tpu.memory_space<vmem>>, %arg3: memref<1x384xf32, #tpu.memory_space<vmem>>, %arg4: memref<384x128xf32, #tpu.memory_space<vmem>>, %arg5: memref<1x128xf32, #tpu.memory_space<vmem>>, %arg6: memref<128x384xf32, #tpu.memory_space<vmem>>, %arg7: memref<1x384xf32, #tpu.memory_space<vmem>>, %arg8: memref<384x128xf32, #tpu.memory_space<vmem>>, %arg9: memref<1x128xf32, #tpu.memory_space<vmem>>, %arg10: memref<16x128xf32, #tpu.memory_space<vmem>>) attributes {dimension_semantics = [#tpu.dimension_semantics<parallel>], iteration_bounds = array<i64: 1>, scalar_prefetch = 0 : i64, scratch_operands = 0 : i64, tpu.core_type = #tpu.core_type<tc>, window_params = [{transform_indices = @transform_0, window_bounds = array<i64: 16, 100>}, {pipeline_mode = #tpu.pipeline_mode<synchronous>, transform_indices = @transform_1, window_bounds = array<i64: 100, 384>}, {pipeline_mode = #tpu.pipeline_mode<synchronous>, transform_indices = @transform_2, window_bounds = array<i64: 1, 384>}, {pipeline_mode = #tpu.pipeline_mode<synchronous>, transform_indices = @transform_3, window_bounds = array<i64: 384, 128>}, {pipeline_mode = #tpu.pipeline_mode<synchronous>, transform_indices = @transform_4, window_bounds = array<i64: 1, 128>}, {pipeline_mode = #tpu.pipeline_mode<synchronous>, transform_indices = @transform_5, window_bounds = array<i64: 128, 384>}, {pipeline_mode = #tpu.pipeline_mode<synchronous>, transform_indices = @transform_6, window_bounds = array<i64: 1, 384>}, {pipeline_mode = #tpu.pipeline_mode<synchronous>, transform_indices = @transform_7, window_bounds = array<i64: 384, 128>}, {pipeline_mode = #tpu.pipeline_mode<synchronous>, transform_indices = @transform_8, window_bounds = array<i64: 1, 128>}, {transform_indices = @transform_9, window_bounds = array<i64: 16, 128>}]} {
    %c0 = arith.constant 0 : index
    %c0_0 = arith.constant 0 : index
    %0 = vector.load %arg1[%c0, %c0_0] : memref<16x100xf32, #tpu.memory_space<vmem>>, vector<16x100xf32>
    %c0_1 = arith.constant 0 : index
    %c0_2 = arith.constant 0 : index
    %1 = vector.load %arg2[%c0_1, %c0_2] : memref<100x384xf32, #tpu.memory_space<vmem>>, vector<100x384xf32>
    %cst = arith.constant dense<0.000000e+00> : vector<16x384xf32>
    %2 = tpu.matmul %0, %1, %cst {dimension_numbers = #tpu.dot_dimension_numbers<[1], [0], [0], [1], [0, 0, 1, 1], [], []>} : vector<16x100xf32>, vector<100x384xf32>, vector<16x384xf32> -> vector<16x384xf32>
    %c0_3 = arith.constant 0 : index
    %c0_4 = arith.constant 0 : index
    %3 = vector.load %arg3[%c0_3, %c0_4] : memref<1x384xf32, #tpu.memory_space<vmem>>, vector<1x384xf32>
    %4 = vector.broadcast %3 : vector<1x384xf32> to vector<16x384xf32>
    %5 = arith.addf %2, %4 : vector<16x384xf32>
    %cst_5 = arith.constant 0.000000e+00 : f32
    %6 = vector.broadcast %cst_5 : f32 to vector<16x384xf32>
    %7 = arith.maximumf %5, %6 : vector<16x384xf32>
    %c0_6 = arith.constant 0 : index
    %c0_7 = arith.constant 0 : index
    %8 = vector.load %arg4[%c0_6, %c0_7] : memref<384x128xf32, #tpu.memory_space<vmem>>, vector<384x128xf32>
    %cst_8 = arith.constant dense<0.000000e+00> : vector<16x128xf32>
    %9 = tpu.matmul %7, %8, %cst_8 {dimension_numbers = #tpu.dot_dimension_numbers<[1], [0], [0], [1], [0, 0, 1, 1], [], []>} : vector<16x384xf32>, vector<384x128xf32>, vector<16x128xf32> -> vector<16x128xf32>
    %c0_9 = arith.constant 0 : index
    %c0_10 = arith.constant 0 : index
    %10 = vector.load %arg5[%c0_9, %c0_10] : memref<1x128xf32, #tpu.memory_space<vmem>>, vector<1x128xf32>
    %11 = vector.broadcast %10 : vector<1x128xf32> to vector<16x128xf32>
    %12 = arith.addf %9, %11 : vector<16x128xf32>
    %c0_11 = arith.constant 0 : index
    %c0_12 = arith.constant 0 : index
    %13 = vector.load %arg6[%c0_11, %c0_12] : memref<128x384xf32, #tpu.memory_space<vmem>>, vector<128x384xf32>
    %cst_13 = arith.constant dense<0.000000e+00> : vector<16x384xf32>
    %14 = tpu.matmul %12, %13, %cst_13 {dimension_numbers = #tpu.dot_dimension_numbers<[1], [0], [0], [1], [0, 0, 1, 1], [], []>} : vector<16x128xf32>, vector<128x384xf32>, vector<16x384xf32> -> vector<16x384xf32>
    %c0_14 = arith.constant 0 : index
    %c0_15 = arith.constant 0 : index
    %15 = vector.load %arg7[%c0_14, %c0_15] : memref<1x384xf32, #tpu.memory_space<vmem>>, vector<1x384xf32>
    %16 = vector.broadcast %15 : vector<1x384xf32> to vector<16x384xf32>
    %17 = arith.addf %14, %16 : vector<16x384xf32>
    %cst_16 = arith.constant 0.000000e+00 : f32
    %18 = vector.broadcast %cst_16 : f32 to vector<16x384xf32>
    %19 = arith.maximumf %17, %18 : vector<16x384xf32>
    %c0_17 = arith.constant 0 : index
    %c0_18 = arith.constant 0 : index
    %20 = vector.load %arg8[%c0_17, %c0_18] : memref<384x128xf32, #tpu.memory_space<vmem>>, vector<384x128xf32>
    %cst_19 = arith.constant dense<0.000000e+00> : vector<16x128xf32>
    %21 = tpu.matmul %19, %20, %cst_19 {dimension_numbers = #tpu.dot_dimension_numbers<[1], [0], [0], [1], [0, 0, 1, 1], [], []>} : vector<16x384xf32>, vector<384x128xf32>, vector<16x128xf32> -> vector<16x128xf32>
    %c0_20 = arith.constant 0 : index
    %c0_21 = arith.constant 0 : index
    %22 = vector.load %arg9[%c0_20, %c0_21] : memref<1x128xf32, #tpu.memory_space<vmem>>, vector<1x128xf32>
    %23 = vector.broadcast %22 : vector<1x128xf32> to vector<16x128xf32>
    %24 = arith.addf %21, %23 : vector<16x128xf32>
    %c0_22 = arith.constant 0 : index
    %c0_23 = arith.constant 0 : index
    %25 = vector.load %arg10[%c0_22, %c0_23] : memref<16x128xf32, #tpu.memory_space<vmem>>, vector<16x128xf32>
    tpu.vector_store %arg10[%c0_22, %c0_23], %24 {strides = array<i32>} : memref<16x128xf32, #tpu.memory_space<vmem>>, vector<16x128xf32>,
    return
  }
  func.func @transform_0(%arg0: i32) -> (i32, i32) {
    %c0_i32 = arith.constant 0 : i32
    %c0_i32_0 = arith.constant 0 : i32
    return %arg0, %c0_i32 : i32, i32
  }
  func.func @transform_1(%arg0: i32) -> (i32, i32) {
    %c0_i32 = arith.constant 0 : i32
    %c0_i32_0 = arith.constant 0 : i32
    %c0_i32_1 = arith.constant 0 : i32
    return %c0_i32, %c0_i32_0 : i32, i32
  }
  func.func @transform_2(%arg0: i32) -> (i32, i32) {
    %c0_i32 = arith.constant 0 : i32
    %c0_i32_0 = arith.constant 0 : i32
    %c0_i32_1 = arith.constant 0 : i32
    return %c0_i32, %c0_i32_0 : i32, i32
  }
  func.func @transform_3(%arg0: i32) -> (i32, i32) {
    %c0_i32 = arith.constant 0 : i32
    %c0_i32_0 = arith.constant 0 : i32
    %c0_i32_1 = arith.constant 0 : i32
    return %c0_i32, %c0_i32_0 : i32, i32
  }
  func.func @transform_4(%arg0: i32) -> (i32, i32) {
    %c0_i32 = arith.constant 0 : i32
    %c0_i32_0 = arith.constant 0 : i32
    %c0_i32_1 = arith.constant 0 : i32
    return %c0_i32, %c0_i32_0 : i32, i32
  }
  func.func @transform_5(%arg0: i32) -> (i32, i32) {
    %c0_i32 = arith.constant 0 : i32
    %c0_i32_0 = arith.constant 0 : i32
    %c0_i32_1 = arith.constant 0 : i32
    return %c0_i32, %c0_i32_0 : i32, i32
  }
  func.func @transform_6(%arg0: i32) -> (i32, i32) {
    %c0_i32 = arith.constant 0 : i32
    %c0_i32_0 = arith.constant 0 : i32
    %c0_i32_1 = arith.constant 0 : i32
    return %c0_i32, %c0_i32_0 : i32, i32
  }
  func.func @transform_7(%arg0: i32) -> (i32, i32) {
    %c0_i32 = arith.constant 0 : i32
    %c0_i32_0 = arith.constant 0 : i32
    %c0_i32_1 = arith.constant 0 : i32
    return %c0_i32, %c0_i32_0 : i32, i32
  }
  func.func @transform_8(%arg0: i32) -> (i32, i32) {
    %c0_i32 = arith.constant 0 : i32
    %c0_i32_0 = arith.constant 0 : i32
    %c0_i32_1 = arith.constant 0 : i32
    return %c0_i32, %c0_i32_0 : i32, i32
  }
  func.func @transform_9(%arg0: i32) -> (i32, i32) {
    %c0_i32 = arith.constant 0 : i32
    %c0_i32_0 = arith.constant 0 : i32
    return %arg0, %c0_i32 : i32, i32
  }
}

</mosaic_0001>

<llo_original>
// kernel: tpu_custom_call.1
$region0: #{tpu_custom_call.1}
  #allocation0 [shape = 'u32[]', space=smem, size = 0x4, offset = 0x4, fixed_abs, tag = 'smem constant byte address 0x4 - core index']
  #allocation1 [shape = 'u32[144,128]{1,0:T(1,128)}', space=vmem, size = 0x12000, scoped, tag = 'internal scratch']
  %s0 = inlined_call_operand.hbm [shape: f32[16,100], index: 0, kind: input, shape index: {}]
  %s1 = inlined_call_operand.hbm [shape: f32[100,384], index: 1, kind: input, shape index: {}]
  %s2 = inlined_call_operand.vmem [shape: f32[1,384], index: 2, kind: input, shape index: {}]
  %s3 = inlined_call_operand.hbm [shape: f32[384,128], index: 3, kind: input, shape index: {}]
  %s4 = inlined_call_operand.vmem [shape: f32[1,128], index: 4, kind: input, shape index: {}]
  %s5 = inlined_call_operand.hbm [shape: f32[128,384], index: 5, kind: input, shape index: {}]
  %s6 = inlined_call_operand.vmem [shape: f32[1,384], index: 6, kind: input, shape index: {}]
  %s7 = inlined_call_operand.hbm [shape: f32[384,128], index: 7, kind: input, shape index: {}]
  %s8 = inlined_call_operand.vmem [shape: f32[1,128], index: 8, kind: input, shape index: {}]
  %s9 = inlined_call_operand.hbm [shape: f32[16,128], index: 9, kind: output, shape index: {}]
  %s10 = sld [smem:[#allocation0]]
  $region66: #{tpu_custom_call.1} parent=0
    _
  %s12 = ssub.s32 1, %s10
  %s13 = scalar_select 0, %s12, %s10
  $region1: #{tpu_custom_call.1} parent=0
    #allocation2 [shape = 'u8[8192]{0}', space=vmem, size = 0x2000, scoped, tag = 'input window, operand 0, single buffered']
    #allocation3 [shape = 's32[1]{0}', space=sflag, size = 0x4, scoped, tag = 'scoped memory for tpu_custom_call.1']
    #allocation4 [shape = 's32[1]{0}', space=sflag, size = 0x4, scoped, tag = 'scoped memory for tpu_custom_call.1']
    #allocation5 [shape = 'u8[159744]{0}', space=vmem, size = 0x27000, scoped, tag = 'input window, operand 1, single buffered']
    #allocation6 [shape = 's32[1]{0}', space=sflag, size = 0x4, scoped, tag = 'scoped memory for tpu_custom_call.1']
    #allocation7 [shape = 'u8[196608]{0}', space=vmem, size = 0x30000, scoped, tag = 'input window, operand 3, single buffered']
    #allocation8 [shape = 'u8[196608]{0}', space=vmem, size = 0x30000, scoped, tag = 'input window, operand 5, single buffered']
    #allocation9 [shape = 's32[1]{0}', space=sflag, size = 0x4, scoped, tag = 'scoped memory for tpu_custom_call.1']
    #allocation10 [shape = 'u8[196608]{0}', space=vmem, size = 0x30000, scoped, tag = 'input window, operand 7, single buffered']
    #allocation11 [shape = 'u8[8192]{0}', space=vmem, size = 0x2000, scoped, tag = 'output window, operand 0, single buffered']
    %14 = vsyncpa [#allocation3], 0
    %15 = vsyncpa [#allocation6], 0
    %16 = vsyncpa [#allocation9], 0
    %17 = vsyncpa [#allocation4], 0
    // Predicated region
    $region2: #{tpu_custom_call.1} parent=1 // pred_check
      _
    $region3: #{tpu_custom_call.1} parent=1 // pred_check_branch
      %19 = sbr.rel (0) target = $region5
    $region4: #{tpu_custom_call.1} parent=1 // pred_region
      %s21 = ssub.s32 256, 256
      %22 = vsyncadd [#allocation3], %s21
      %s23 = sshll.u32 [#allocation2], 4
      %s24 = int_to_ptr.vmem [resolvable:$true] %s23
      %29 = dma.hbm_to_vmem [thread:$0]  %s0, 256, %s24, [#allocation3], 128, 128, 8
    $region5: #{tpu_custom_call.1} parent=1 // pred_fallthru
      _
    // Predicated region
    $region6: #{tpu_custom_call.1} parent=1 // pred_check
      _
    $region7: #{tpu_custom_call.1} parent=1 // pred_check_branch
      %31 = sbr.rel (0) target = $region9
    $region8: #{tpu_custom_call.1} parent=1 // pred_region
      %s33 = ssub.s32 4992, 4992
      %34 = vsyncadd [#allocation6], %s33
      %s35 = sshll.u32 [#allocation5], 4
      %s36 = int_to_ptr.vmem [resolvable:$true] %s35
      %41 = dma.hbm_to_vmem [thread:$0]  %s1, 4992, %s36, [#allocation6], 384, 384, 24
    $region9: #{tpu_custom_call.1} parent=1 // pred_fallthru
      _
    // Predicated region
    $region10: #{tpu_custom_call.1} parent=1 // pred_check
      _
    $region11: #{tpu_custom_call.1} parent=1 // pred_check_branch
      %43 = sbr.rel (0) target = $region13
    $region12: #{tpu_custom_call.1} parent=1 // pred_region
      _
    $region13: #{tpu_custom_call.1} parent=1 // pred_fallthru
      _
    // Predicated region
    $region14: #{tpu_custom_call.1} parent=1 // pred_check
      _
    $region15: #{tpu_custom_call.1} parent=1 // pred_check_branch
      %45 = sbr.rel (0) target = $region17
    $region16: #{tpu_custom_call.1} parent=1 // pred_region
      %s47 = ssub.s32 6144, 6144
      %48 = vsyncadd [#allocation6], %s47
      %s49 = sshll.u32 [#allocation7], 4
      %s50 = int_to_ptr.vmem [resolvable:$true] %s49
      %55 = dma.hbm_to_vmem [thread:$0]  %s3, 6144, %s50, [#allocation6], 128, 128, 8
    $region17: #{tpu_custom_call.1} parent=1 // pred_fallthru
      _
    // Predicated region
    $region18: #{tpu_custom_call.1} parent=1 // pred_check
      _
    $region19: #{tpu_custom_call.1} parent=1 // pred_check_branch
      %57 = sbr.rel (0) target = $region21
    $region20: #{tpu_custom_call.1} parent=1 // pred_region
      _
    $region21: #{tpu_custom_call.1} parent=1 // pred_fallthru
      _
    // Predicated region
    $region22: #{tpu_custom_call.1} parent=1 // pred_check
      _
    $region23: #{tpu_custom_call.1} parent=1 // pred_check_branch
      %59 = sbr.rel (0) target = $region25
    $region24: #{tpu_custom_call.1} parent=1 // pred_region
      %s61 = ssub.s32 6144, 6144
      %62 = vsyncadd [#allocation9], %s61
      %s63 = sshll.u32 [#allocation8], 4
      %s64 = int_to_ptr.vmem [resolvable:$true] %s63
      %69 = dma.hbm_to_vmem [thread:$0]  %s5, 6144, %s64, [#allocation9], 384, 384, 24
    $region25: #{tpu_custom_call.1} parent=1 // pred_fallthru
      _
    // Predicated region
    $region26: #{tpu_custom_call.1} parent=1 // pred_check
      _
    $region27: #{tpu_custom_call.1} parent=1 // pred_check_branch
      %71 = sbr.rel (0) target = $region29
    $region28: #{tpu_custom_call.1} parent=1 // pred_region
      _
    $region29: #{tpu_custom_call.1} parent=1 // pred_fallthru
      _
    // Predicated region
    $region30: #{tpu_custom_call.1} parent=1 // pred_check
      _
    $region31: #{tpu_custom_call.1} parent=1 // pred_check_branch
      %73 = sbr.rel (0) target = $region33
    $region32: #{tpu_custom_call.1} parent=1 // pred_region
      %s75 = ssub.s32 6144, 6144
      %76 = vsyncadd [#allocation9], %s75
      %s77 = sshll.u32 [#allocation10], 4
      %s78 = int_to_ptr.vmem [resolvable:$true] %s77
      %83 = dma.hbm_to_vmem [thread:$0]  %s7, 6144, %s78, [#allocation9], 128, 128, 8
    $region33: #{tpu_custom_call.1} parent=1 // pred_fallthru
      _
    // Predicated region
    $region34: #{tpu_custom_call.1} parent=1 // pred_check
      _
    $region35: #{tpu_custom_call.1} parent=1 // pred_check_branch
      %85 = sbr.rel (0) target = $region37
    $region36: #{tpu_custom_call.1} parent=1 // pred_region
      _
    $region37: #{tpu_custom_call.1} parent=1 // pred_fallthru
      _
    // Predicated region
    $region38: #{tpu_custom_call.1} parent=1 // pred_check
      _
    $region39: #{tpu_custom_call.1} parent=1 // pred_check_branch
      %87 = sbr.rel (0) target = $region41
    $region40: #{tpu_custom_call.1} parent=1 // pred_region
      %88 = dma.done [#allocation3], 256
    $region41: #{tpu_custom_call.1} parent=1 // pred_fallthru
      _
    // Predicated region
    $region42: #{tpu_custom_call.1} parent=1 // pred_check
      _
    $region43: #{tpu_custom_call.1} parent=1 // pred_check_branch
      %90 = sbr.rel (0) target = $region45
    $region44: #{tpu_custom_call.1} parent=1 // pred_region
      %91 = dma.done [#allocation6], 4992
    $region45: #{tpu_custom_call.1} parent=1 // pred_fallthru
      _
    // Predicated region
    $region46: #{tpu_custom_call.1} parent=1 // pred_check
      _
    $region47: #{tpu_custom_call.1} parent=1 // pred_check_branch
      %93 = sbr.rel (0) target = $region49
    $region48: #{tpu_custom_call.1} parent=1 // pred_region
      %94 = dma.done [#allocation6], 6144
    $region49: #{tpu_custom_call.1} parent=1 // pred_fallthru
      _
    // Predicated region
    $region50: #{tpu_custom_call.1} parent=1 // pred_check
      _
    $region51: #{tpu_custom_call.1} parent=1 // pred_check_branch
      %96 = sbr.rel (0) target = $region53
    $region52: #{tpu_custom_call.1} parent=1 // pred_region
      %97 = dma.done [#allocation9], 6144
    $region53: #{tpu_custom_call.1} parent=1 // pred_fallthru
      _
    // Predicated region
    $region54: #{tpu_custom_call.1} parent=1 // pred_check
      _
    $region55: #{tpu_custom_call.1} parent=1 // pred_check_branch
      %99 = sbr.rel (0) target = $region57
    $region56: #{tpu_custom_call.1} parent=1 // pred_region
      %100 = dma.done [#allocation9], 6144
    $region57: #{tpu_custom_call.1} parent=1 // pred_fallthru
      _
    %v101 = vld [vmem:[#allocation2] sm:$0xff]
    %v102 = vld [vmem:[#allocation2 + $0x8] sm:$0xff]
    %v103 = vld [vmem:[#allocation5] sm:$0xff]
    %v104 = vld [vmem:[#allocation5 + $0x8] sm:$0xff]
    %v105 = vld [vmem:[#allocation5 + $0x10] sm:$0xff]
    %v106 = vld [vmem:[#allocation5 + $0x18] sm:$0xff]
    %v107 = vld [vmem:[#allocation5 + $0x20] sm:$0xff]
    %v108 = vld [vmem:[#allocation5 + $0x28] sm:$0xff]
    %v109 = vld [vmem:[#allocation5 + $0x30] sm:$0xff]
    %v110 = vld [vmem:[#allocation5 + $0x38] sm:$0xff]
    %v111 = vld [vmem:[#allocation5 + $0x40] sm:$0xff]
    %v112 = vld [vmem:[#allocation5 + $0x48] sm:$0xff]
    %v113 = vld [vmem:[#allocation5 + $0x50] sm:$0xff]
    %v114 = vld [vmem:[#allocation5 + $0x58] sm:$0xff]
    %v115 = vld [vmem:[#allocation5 + $0x60] sm:$0xff]
    %v116 = vld [vmem:[#allocation5 + $0x68] sm:$0xff]
    %v117 = vld [vmem:[#allocation5 + $0x70] sm:$0xff]
    %v118 = vld [vmem:[#allocation5 + $0x78] sm:$0xff]
    %v119 = vld [vmem:[#allocation5 + $0x80] sm:$0xff]
    %v120 = vld [vmem:[#allocation5 + $0x88] sm:$0xff]
    %v121 = vld [vmem:[#allocation5 + $0x90] sm:$0xff]
    %v122 = vld [vmem:[#allocation5 + $0x98] sm:$0xff]
    %v123 = vld [vmem:[#allocation5 + $0xa0] sm:$0xff]
    %v124 = vld [vmem:[#allocation5 + $0xa8] sm:$0xff]
    %v125 = vld [vmem:[#allocation5 + $0xb0] sm:$0xff]
    %v126 = vld [vmem:[#allocation5 + $0xb8] sm:$0xff]
    %v127 = vld [vmem:[#allocation5 + $0xc0] sm:$0xff]
    %v128 = vld [vmem:[#allocation5 + $0xc8] sm:$0xff]
    %v129 = vld [vmem:[#allocation5 + $0xd0] sm:$0xff]
    %v130 = vld [vmem:[#allocation5 + $0xd8] sm:$0xff]
    %v131 = vld [vmem:[#allocation5 + $0xe0] sm:$0xff]
    %v132 = vld [vmem:[#allocation5 + $0xe8] sm:$0xff]
    %v133 = vld [vmem:[#allocation5 + $0xf0] sm:$0xff]
    %v134 = vld [vmem:[#allocation5 + $0xf8] sm:$0xff]
    %v135 = vld [vmem:[#allocation5 + $0x100] sm:$0xff]
    %v136 = vld [vmem:[#allocation5 + $0x108] sm:$0xff]
    %v137 = vld [vmem:[#allocation5 + $0x110] sm:$0xff]
    %v138 = vld [vmem:[#allocation5 + $0x118] sm:$0xff]
    %v139 = vld [vmem:[#allocation5 + $0x120] sm:$0xf]
    %v140 = vld [vmem:[#allocation5 + $0x128] sm:$0xf]
    %v141 = vld [vmem:[#allocation5 + $0x130] sm:$0xf]
    %v142 = vld [vmem:[%s2] sm:$0x7]
    %v144 = vlaneseq
    %v145 = vshrl.u32 %v144, 7
    %v146 = vsub.s32 0, %v145
    %v147 = vrot.slane %v142, %v146
    %v148 = vlaneseq
    %v149 = vshrl.u32 %v148, 7
    %v150 = vsub.s32 1, %v149
    %v151 = vrot.slane %v142, %v150
    %v152 = vlaneseq
    %v153 = vshrl.u32 %v152, 7
    %v154 = vsub.s32 2, %v153
    %v155 = vrot.slane %v142, %v154
    %vm159 = vcmask 818176
    %v161 = vsel %vm159, %v101, 0
    %v164 = vsel %vm159, %v102, 0
    %vm166 = vcmask 1043456
    %v168 = vsel %vm166, %v139, 0
    %v171 = vsel %vm166, %v140, 0
    %v174 = vsel %vm166, %v141, 0
    %176 = vmatprep.subr.mxu0 %v104
    %177 = vmatpush1.msra.mxu0 %v103
    %178 = vmatprep.subr.mxu0 %v107
    %179 = vmatpush1.msra.mxu0 %v106
    %180 = vmatprep.subr.mxu0 %v110
    %181 = vmatpush1.msra.mxu0 %v109
    %182 = vmatprep.subr.mxu0 %v113
    %183 = vmatpush1.msra.mxu0 %v112
    %184 = vmatprep.subr.mxu0 %v116
    %185 = vmatpush1.msra.mxu0 %v115
    %186 = vmatprep.subr.mxu0 %v119
    %187 = vmatpush1.msra.mxu0 %v118
    %188 = vmatprep.subr.mxu0 %v122
    %189 = vmatpush1.msra.mxu0 %v121
    %190 = vmatprep.subr.mxu0 %v125
    %191 = vmatpush1.msra.mxu0 %v124
    %192 = vmatprep.subr.mxu0 %v128
    %193 = vmatpush1.msra.mxu0 %v127
    %194 = vmatprep.subr.mxu0 %v131
    %195 = vmatpush1.msra.mxu0 %v130
    %196 = vmatprep.subr.mxu0 %v134
    %197 = vmatpush1.msra.mxu0 %v133
    %198 = vmatprep.subr.mxu0 %v137
    %199 = vmatpush1.msra.mxu0 %v136
    %200 = vmatprep.subr.mxu0 %v171
    %201 = vmatpush1.msra.mxu0 %v168
    %202 = vmatprep.subr.mxu0 0.0
    %203 = vmatpush1.msra.mxu0 0.0
    %204 = vmatprep.subr.mxu0 0.0
    %205 = vmatpush1.msra.mxu0 0.0
    %206 = vmatprep.subr.mxu0 0.0
    %207 = vmatpush1.msra.mxu0 0.0
    %208 = vmatprep.subr.mxu0 0.0
    %209 = vmatpush1.msra.mxu0 0.0
    %210 = vmatprep.subr.mxu0 0.0
    %211 = vmatpush1.msra.mxu0 0.0
    %212 = vmatprep.subr.mxu0 0.0
    %213 = vmatpush1.msra.mxu0 0.0
    %214 = vmatprep.subr.mxu0 0.0
    %215 = vmatpush1.msra.mxu0 0.0
    %216 = vmatprep.subr.mxu0 0.0
    %217 = vmatpush1.msra.mxu0 0.0
    %218 = vmatprep.subr.mxu0 0.0
    %219 = vmatpush1.msra.mxu0 0.0
    %220 = vmatprep.subr.mxu0 0.0
    %221 = vmatpush1.msra.mxu0 0.0
    %222 = vmatprep.subr.mxu0 0.0
    %223 = vmatpush1.msra.mxu0 0.0
    %224 = vmatprep.subr.mxu0 0.0
    %225 = vmatpush1.msra.mxu0 0.0
    %226 = vmatprep.subr.mxu0 0.0
    %227 = vmatpush1.msra.mxu0 0.0
    %228 = vmatprep.subr.mxu0 0.0
    %229 = vmatpush1.msra.mxu0 0.0
    %230 = vmatprep.subr.mxu0 0.0
    %231 = vmatpush1.msra.mxu0 0.0
    %232 = vmatprep.subr.mxu0 0.0
    %233 = vmatpush1.msra.mxu0 0.0
    %234 = vmatprep.subr.mxu0 0.0
    %235 = vmatpush1.msra.mxu0 0.0
    %236 = vmatprep.subr.mxu0 0.0
    %237 = vmatpush1.msra.mxu0 0.0
    %238 = vmatprep.subr.mxu0 0.0
    %239 = vmatpush1.msra.mxu0 0.0
    %240 = vmatprep.mubr.f32.mxu0 0.0
    %241 = vmatmul.mubr.f32.gmra.mrb[0].mxu0 %v161
    %v242 = vpop.f32.mrb[0].mxu0
    %v243 = vadd.f32 %v147, %v242
    %v244 = vpop.f32.mrb[0].mxu0
    %v245 = vadd.f32 %v151, %v244
    %246 = vmatprep.mubr.f32.mxu0 0.0
    %247 = vmatmul.mubr.f32.gmra.mrb[0].mxu0 %v164
    %v248 = vpop.f32.mrb[0].mxu0
    %v249 = vadd.f32 %v147, %v248
    %v250 = vpop.f32.mrb[0].mxu0
    %v251 = vadd.f32 %v151, %v250
    %252 = vdwg.mxu0
    %253 = vmatprep.subr.mxu0 0.0
    %254 = vmatpush1.msra.mxu0 %v105
    %255 = vmatprep.subr.mxu0 0.0
    %256 = vmatpush1.msra.mxu0 %v108
    %257 = vmatprep.subr.mxu0 0.0
    %258 = vmatpush1.msra.mxu0 %v111
    %259 = vmatprep.subr.mxu0 0.0
    %260 = vmatpush1.msra.mxu0 %v114
    %261 = vmatprep.subr.mxu0 0.0
    %262 = vmatpush1.msra.mxu0 %v117
    %263 = vmatprep.subr.mxu0 0.0
    %264 = vmatpush1.msra.mxu0 %v120
    %265 = vmatprep.subr.mxu0 0.0
    %266 = vmatpush1.msra.mxu0 %v123
    %267 = vmatprep.subr.mxu0 0.0
    %268 = vmatpush1.msra.mxu0 %v126
    %269 = vmatprep.subr.mxu0 0.0
    %270 = vmatpush1.msra.mxu0 %v129
    %271 = vmatprep.subr.mxu0 0.0
    %272 = vmatpush1.msra.mxu0 %v132
    %273 = vmatprep.subr.mxu0 0.0
    %274 = vmatpush1.msra.mxu0 %v135
    %275 = vmatprep.subr.mxu0 0.0
    %276 = vmatpush1.msra.mxu0 %v138
    %277 = vmatprep.subr.mxu0 0.0
    %278 = vmatpush1.msra.mxu0 %v174
    %279 = vmatprep.subr.mxu0 0.0
    %280 = vmatpush1.msra.mxu0 0.0
    %281 = vmatprep.subr.mxu0 0.0
    %282 = vmatpush1.msra.mxu0 0.0
    %283 = vmatprep.subr.mxu0 0.0
    %284 = vmatpush1.msra.mxu0 0.0
    %285 = vmatprep.subr.mxu0 0.0
    %286 = vmatpush1.msra.mxu0 0.0
    %287 = vmatprep.subr.mxu0 0.0
    %288 = vmatpush1.msra.mxu0 0.0
    %289 = vmatprep.subr.mxu0 0.0
    %290 = vmatpush1.msra.mxu0 0.0
    %291 = vmatprep.subr.mxu0 0.0
    %292 = vmatpush1.msra.mxu0 0.0
    %293 = vmatprep.subr.mxu0 0.0
    %294 = vmatpush1.msra.mxu0 0.0
    %295 = vmatprep.subr.mxu0 0.0
    %296 = vmatpush1.msra.mxu0 0.0
    %297 = vmatprep.subr.mxu0 0.0
    %298 = vmatpush1.msra.mxu0 0.0
    %299 = vmatprep.subr.mxu0 0.0
    %300 = vmatpush1.msra.mxu0 0.0
    %301 = vmatprep.subr.mxu0 0.0
    %302 = vmatpush1.msra.mxu0 0.0
    %303 = vmatprep.subr.mxu0 0.0
    %304 = vmatpush1.msra.mxu0 0.0
    %305 = vmatprep.subr.mxu0 0.0
    %306 = vmatpush1.msra.mxu0 0.0
    %307 = vmatprep.subr.mxu0 0.0
    %308 = vmatpush1.msra.mxu0 0.0
    %309 = vmatprep.subr.mxu0 0.0
    %310 = vmatpush1.msra.mxu0 0.0
    %311 = vmatprep.subr.mxu0 0.0
    %312 = vmatpush1.msra.mxu0 0.0
    %313 = vmatprep.subr.mxu0 0.0
    %314 = vmatpush1.msra.mxu0 0.0
    %315 = vmatprep.subr.mxu0 0.0
    %316 = vmatpush1.msra.mxu0 0.0
    %317 = vmatprep.mubr.f32.mxu0 0.0
    %318 = vmatmul.mubr.f32.gmra.mrb[0].mxu0 %v161
    %v319 = vpop.f32.mrb[0].mxu0
    %v320 = vadd.f32 %v155, %v319
    %v321 = vpop.f32.mrb[0].mxu0
    %322 = vmatprep.mubr.f32.mxu0 0.0
    %323 = vmatmul.mubr.f32.gmra.mrb[0].mxu0 %v164
    %v324 = vpop.f32.mrb[0].mxu0
    %v325 = vadd.f32 %v155, %v324
    %v326 = vpop.f32.mrb[0].mxu0
    %327 = vdwg.mxu0
    %v328 = vmax.f32 %v243, 0.0
    %v329 = vmax.f32 %v245, 0.0
    %v330 = vmax.f32 %v320, 0.0
    %v331 = vmax.f32 %v249, 0.0
    %v332 = vmax.f32 %v251, 0.0
    %v333 = vmax.f32 %v325, 0.0
    %v334 = vld [vmem:[#allocation7] sm:$0xff]
    %v335 = vld [vmem:[#allocation7 + $0x8] sm:$0xff]
    %v336 = vld [vmem:[#allocation7 + $0x10] sm:$0xff]
    %v337 = vld [vmem:[#allocation7 + $0x18] sm:$0xff]
    %v338 = vld [vmem:[#allocation7 + $0x20] sm:$0xff]
    %v339 = vld [vmem:[#allocation7 + $0x28] sm:$0xff]
    %v340 = vld [vmem:[#allocation7 + $0x30] sm:$0xff]
    %v341 = vld [vmem:[#allocation7 + $0x38] sm:$0xff]
    %v342 = vld [vmem:[#allocation7 + $0x40] sm:$0xff]
    %v343 = vld [vmem:[#allocation7 + $0x48] sm:$0xff]
    %v344 = vld [vmem:[#allocation7 + $0x50] sm:$0xff]
    %v345 = vld [vmem:[#allocation7 + $0x58] sm:$0xff]
    %v346 = vld [vmem:[#allocation7 + $0x60] sm:$0xff]
    %v347 = vld [vmem:[#allocation7 + $0x68] sm:$0xff]
    %v348 = vld [vmem:[#allocation7 + $0x70] sm:$0xff]
    %v349 = vld [vmem:[#allocation7 + $0x78] sm:$0xff]
    %v350 = vld [vmem:[#allocation7 + $0x80] sm:$0xff]
    %v351 = vld [vmem:[#allocation7 + $0x88] sm:$0xff]
    %v352 = vld [vmem:[#allocation7 + $0x90] sm:$0xff]
    %v353 = vld [vmem:[#allocation7 + $0x98] sm:$0xff]
    %v354 = vld [vmem:[#allocation7 + $0xa0] sm:$0xff]
    %v355 = vld [vmem:[#allocation7 + $0xa8] sm:$0xff]
    %v356 = vld [vmem:[#allocation7 + $0xb0] sm:$0xff]
    %v357 = vld [vmem:[#allocation7 + $0xb8] sm:$0xff]
    %v358 = vld [vmem:[#allocation7 + $0xc0] sm:$0xff]
    %v359 = vld [vmem:[#allocation7 + $0xc8] sm:$0xff]
    %v360 = vld [vmem:[#allocation7 + $0xd0] sm:$0xff]
    %v361 = vld [vmem:[#allocation7 + $0xd8] sm:$0xff]
    %v362 = vld [vmem:[#allocation7 + $0xe0] sm:$0xff]
    %v363 = vld [vmem:[#allocation7 + $0xe8] sm:$0xff]
    %v364 = vld [vmem:[#allocation7 + $0xf0] sm:$0xff]
    %v365 = vld [vmem:[#allocation7 + $0xf8] sm:$0xff]
    %v366 = vld [vmem:[#allocation7 + $0x100] sm:$0xff]
    %v367 = vld [vmem:[#allocation7 + $0x108] sm:$0xff]
    %v368 = vld [vmem:[#allocation7 + $0x110] sm:$0xff]
    %v369 = vld [vmem:[#allocation7 + $0x118] sm:$0xff]
    %v370 = vld [vmem:[#allocation7 + $0x120] sm:$0xff]
    %v371 = vld [vmem:[#allocation7 + $0x128] sm:$0xff]
    %v372 = vld [vmem:[#allocation7 + $0x130] sm:$0xff]
    %v373 = vld [vmem:[#allocation7 + $0x138] sm:$0xff]
    %v374 = vld [vmem:[#allocation7 + $0x140] sm:$0xff]
    %v375 = vld [vmem:[#allocation7 + $0x148] sm:$0xff]
    %v376 = vld [vmem:[#allocation7 + $0x150] sm:$0xff]
    %v377 = vld [vmem:[#allocation7 + $0x158] sm:$0xff]
    %v378 = vld [vmem:[#allocation7 + $0x160] sm:$0xff]
    %v379 = vld [vmem:[#allocation7 + $0x168] sm:$0xff]
    %v380 = vld [vmem:[#allocation7 + $0x170] sm:$0xff]
    %v381 = vld [vmem:[#allocation7 + $0x178] sm:$0xff]
    %v382 = vld [vmem:[%s4] sm:$0x1]
    %v384 = vlaneseq
    %v385 = vshrl.u32 %v384, 7
    %v386 = vsub.s32 0, %v385
    %v387 = vrot.slane %v382, %v386
    %389 = vmatprep.subr.mxu0 0.0
    %390 = vmatpush1.msra.mxu0 %v334
    %391 = vmatprep.subr.mxu0 0.0
    %392 = vmatpush1.msra.mxu0 %v335
    %393 = vmatprep.subr.mxu0 0.0
    %394 = vmatpush1.msra.mxu0 %v336
    %395 = vmatprep.subr.mxu0 0.0
    %396 = vmatpush1.msra.mxu0 %v337
    %397 = vmatprep.subr.mxu0 0.0
    %398 = vmatpush1.msra.mxu0 %v338
    %399 = vmatprep.subr.mxu0 0.0
    %400 = vmatpush1.msra.mxu0 %v339
    %401 = vmatprep.subr.mxu0 0.0
    %402 = vmatpush1.msra.mxu0 %v340
    %403 = vmatprep.subr.mxu0 0.0
    %404 = vmatpush1.msra.mxu0 %v341
    %405 = vmatprep.subr.mxu0 0.0
    %406 = vmatpush1.msra.mxu0 %v342
    %407 = vmatprep.subr.mxu0 0.0
    %408 = vmatpush1.msra.mxu0 %v343
    %409 = vmatprep.subr.mxu0 0.0
    %410 = vmatpush1.msra.mxu0 %v344
    %411 = vmatprep.subr.mxu0 0.0
    %412 = vmatpush1.msra.mxu0 %v345
    %413 = vmatprep.subr.mxu0 0.0
    %414 = vmatpush1.msra.mxu0 %v346
    %415 = vmatprep.subr.mxu0 0.0
    %416 = vmatpush1.msra.mxu0 %v347
    %417 = vmatprep.subr.mxu0 0.0
    %418 = vmatpush1.msra.mxu0 %v348
    %419 = vmatprep.subr.mxu0 0.0
    %420 = vmatpush1.msra.mxu0 %v349
    %421 = vmatprep.subr.mxu0 0.0
    %422 = vmatpush1.msra.mxu0 %v350
    %423 = vmatprep.subr.mxu0 0.0
    %424 = vmatpush1.msra.mxu0 %v351
    %425 = vmatprep.subr.mxu0 0.0
    %426 = vmatpush1.msra.mxu0 %v352
    %427 = vmatprep.subr.mxu0 0.0
    %428 = vmatpush1.msra.mxu0 %v353
    %429 = vmatprep.subr.mxu0 0.0
    %430 = vmatpush1.msra.mxu0 %v354
    %431 = vmatprep.subr.mxu0 0.0
    %432 = vmatpush1.msra.mxu0 %v355
    %433 = vmatprep.subr.mxu0 0.0
    %434 = vmatpush1.msra.mxu0 %v356
    %435 = vmatprep.subr.mxu0 0.0
    %436 = vmatpush1.msra.mxu0 %v357
    %437 = vmatprep.subr.mxu0 0.0
    %438 = vmatpush1.msra.mxu0 %v358
    %439 = vmatprep.subr.mxu0 0.0
    %440 = vmatpush1.msra.mxu0 %v359
    %441 = vmatprep.subr.mxu0 0.0
    %442 = vmatpush1.msra.mxu0 %v360
    %443 = vmatprep.subr.mxu0 0.0
    %444 = vmatpush1.msra.mxu0 %v361
    %445 = vmatprep.subr.mxu0 0.0
    %446 = vmatpush1.msra.mxu0 %v362
    %447 = vmatprep.subr.mxu0 0.0
    %448 = vmatpush1.msra.mxu0 %v363
    %449 = vmatprep.subr.mxu0 0.0
    %450 = vmatpush1.msra.mxu0 %v364
    %451 = vmatprep.subr.mxu0 0.0
    %452 = vmatpush1.msra.mxu0 %v365
    %453 = vmatprep.mubr.f32.mxu0 %v329
    %454 = vmatmul.mubr.f32.gmra.mrb[0].mxu0 %v328
    %v455 = vpop.f32.mrb[0].mxu0
    %v456 = vadd.f32 %v387, %v455
    %v457 = vpop.f32.mrb[0].mxu0
    %458 = vmatprep.mubr.f32.mxu0 %v332
    %459 = vmatmul.mubr.f32.gmra.mrb[0].mxu0 %v331
    %v460 = vpop.f32.mrb[0].mxu0
    %v461 = vadd.f32 %v387, %v460
    %v462 = vpop.f32.mrb[0].mxu0
    %463 = vdwg.mxu0
    %464 = vmatprep.subr.mxu0 0.0
    %465 = vmatpush1.msra.mxu0 %v366
    %466 = vmatprep.subr.mxu0 0.0
    %467 = vmatpush1.msra.mxu0 %v367
    %468 = vmatprep.subr.mxu0 0.0
    %469 = vmatpush1.msra.mxu0 %v368
    %470 = vmatprep.subr.mxu0 0.0
    %471 = vmatpush1.msra.mxu0 %v369
    %472 = vmatprep.subr.mxu0 0.0
    %473 = vmatpush1.msra.mxu0 %v370
    %474 = vmatprep.subr.mxu0 0.0
    %475 = vmatpush1.msra.mxu0 %v371
    %476 = vmatprep.subr.mxu0 0.0
    %477 = vmatpush1.msra.mxu0 %v372
    %478 = vmatprep.subr.mxu0 0.0
    %479 = vmatpush1.msra.mxu0 %v373
    %480 = vmatprep.subr.mxu0 0.0
    %481 = vmatpush1.msra.mxu0 %v374
    %482 = vmatprep.subr.mxu0 0.0
    %483 = vmatpush1.msra.mxu0 %v375
    %484 = vmatprep.subr.mxu0 0.0
    %485 = vmatpush1.msra.mxu0 %v376
    %486 = vmatprep.subr.mxu0 0.0
    %487 = vmatpush1.msra.mxu0 %v377
    %488 = vmatprep.subr.mxu0 0.0
    %489 = vmatpush1.msra.mxu0 %v378
    %490 = vmatprep.subr.mxu0 0.0
    %491 = vmatpush1.msra.mxu0 %v379
    %492 = vmatprep.subr.mxu0 0.0
    %493 = vmatpush1.msra.mxu0 %v380
    %494 = vmatprep.subr.mxu0 0.0
    %495 = vmatpush1.msra.mxu0 %v381
    %496 = vmatprep.subr.mxu0 0.0
    %497 = vmatpush1.msra.mxu0 0.0
    %498 = vmatprep.subr.mxu0 0.0
    %499 = vmatpush1.msra.mxu0 0.0
    %500 = vmatprep.subr.mxu0 0.0
    %501 = vmatpush1.msra.mxu0 0.0
    %502 = vmatprep.subr.mxu0 0.0
    %503 = vmatpush1.msra.mxu0 0.0
    %504 = vmatprep.subr.mxu0 0.0
    %505 = vmatpush1.msra.mxu0 0.0
    %506 = vmatprep.subr.mxu0 0.0
    %507 = vmatpush1.msra.mxu0 0.0
    %508 = vmatprep.subr.mxu0 0.0
    %509 = vmatpush1.msra.mxu0 0.0
    %510 = vmatprep.subr.mxu0 0.0
    %511 = vmatpush1.msra.mxu0 0.0
    %512 = vmatprep.subr.mxu0 0.0
    %513 = vmatpush1.msra.mxu0 0.0
    %514 = vmatprep.subr.mxu0 0.0
    %515 = vmatpush1.msra.mxu0 0.0
    %516 = vmatprep.subr.mxu0 0.0
    %517 = vmatpush1.msra.mxu0 0.0
    %518 = vmatprep.subr.mxu0 0.0
    %519 = vmatpush1.msra.mxu0 0.0
    %520 = vmatprep.subr.mxu0 0.0
    %521 = vmatpush1.msra.mxu0 0.0
    %522 = vmatprep.subr.mxu0 0.0
    %523 = vmatpush1.msra.mxu0 0.0
    %524 = vmatprep.subr.mxu0 0.0
    %525 = vmatpush1.msra.mxu0 0.0
    %526 = vmatprep.subr.mxu0 0.0
    %527 = vmatpush1.msra.mxu0 0.0
    %528 = vmatprep.mubr.f32.mxu0 0.0
    %529 = vmatmul.mubr.f32.gmra.mrb[0].mxu0 %v330
    %v530 = vpop.f32.mrb[0].mxu0
    %v531 = vadd.f32 %v456, %v530
    %v532 = vpop.f32.mrb[0].mxu0
    %533 = vmatprep.mubr.f32.mxu0 0.0
    %534 = vmatmul.mubr.f32.gmra.mrb[0].mxu0 %v333
    %v535 = vpop.f32.mrb[0].mxu0
    %v536 = vadd.f32 %v461, %v535
    %v537 = vpop.f32.mrb[0].mxu0
    %538 = vdwg.mxu0
    %v539 = vld [vmem:[#allocation8] sm:$0xff]
    %v540 = vld [vmem:[#allocation8 + $0x8] sm:$0xff]
    %v541 = vld [vmem:[#allocation8 + $0x10] sm:$0xff]
    %v542 = vld [vmem:[#allocation8 + $0x18] sm:$0xff]
    %v543 = vld [vmem:[#allocation8 + $0x20] sm:$0xff]
    %v544 = vld [vmem:[#allocation8 + $0x28] sm:$0xff]
    %v545 = vld [vmem:[#allocation8 + $0x30] sm:$0xff]
    %v546 = vld [vmem:[#allocation8 + $0x38] sm:$0xff]
    %v547 = vld [vmem:[#allocation8 + $0x40] sm:$0xff]
    %v548 = vld [vmem:[#allocation8 + $0x48] sm:$0xff]
    %v549 = vld [vmem:[#allocation8 + $0x50] sm:$0xff]
    %v550 = vld [vmem:[#allocation8 + $0x58] sm:$0xff]
    %v551 = vld [vmem:[#allocation8 + $0x60] sm:$0xff]
    %v552 = vld [vmem:[#allocation8 + $0x68] sm:$0xff]
    %v553 = vld [vmem:[#allocation8 + $0x70] sm:$0xff]
    %v554 = vld [vmem:[#allocation8 + $0x78] sm:$0xff]
    %v555 = vld [vmem:[#allocation8 + $0x80] sm:$0xff]
    %v556 = vld [vmem:[#allocation8 + $0x88] sm:$0xff]
    %v557 = vld [vmem:[#allocation8 + $0x90] sm:$0xff]
    %v558 = vld [vmem:[#allocation8 + $0x98] sm:$0xff]
    %v559 = vld [vmem:[#allocation8 + $0xa0] sm:$0xff]
    %v560 = vld [vmem:[#allocation8 + $0xa8] sm:$0xff]
    %v561 = vld [vmem:[#allocation8 + $0xb0] sm:$0xff]
    %v562 = vld [vmem:[#allocation8 + $0xb8] sm:$0xff]
    %v563 = vld [vmem:[#allocation8 + $0xc0] sm:$0xff]
    %v564 = vld [vmem:[#allocation8 + $0xc8] sm:$0xff]
    %v565 = vld [vmem:[#allocation8 + $0xd0] sm:$0xff]
    %v566 = vld [vmem:[#allocation8 + $0xd8] sm:$0xff]
    %v567 = vld [vmem:[#allocation8 + $0xe0] sm:$0xff]
    %v568 = vld [vmem:[#allocation8 + $0xe8] sm:$0xff]
    %v569 = vld [vmem:[#allocation8 + $0xf0] sm:$0xff]
    %v570 = vld [vmem:[#allocation8 + $0xf8] sm:$0xff]
    %v571 = vld [vmem:[#allocation8 + $0x100] sm:$0xff]
    %v572 = vld [vmem:[#allocation8 + $0x108] sm:$0xff]
    %v573 = vld [vmem:[#allocation8 + $0x110] sm:$0xff]
    %v574 = vld [vmem:[#allocation8 + $0x118] sm:$0xff]
    %v575 = vld [vmem:[#allocation8 + $0x120] sm:$0xff]
    %v576 = vld [vmem:[#allocation8 + $0x128] sm:$0xff]
    %v577 = vld [vmem:[#allocation8 + $0x130] sm:$0xff]
    %v578 = vld [vmem:[#allocation8 + $0x138] sm:$0xff]
    %v579 = vld [vmem:[#allocation8 + $0x140] sm:$0xff]
    %v580 = vld [vmem:[#allocation8 + $0x148] sm:$0xff]
    %v581 = vld [vmem:[#allocation8 + $0x150] sm:$0xff]
    %v582 = vld [vmem:[#allocation8 + $0x158] sm:$0xff]
    %v583 = vld [vmem:[#allocation8 + $0x160] sm:$0xff]
    %v584 = vld [vmem:[#allocation8 + $0x168] sm:$0xff]
    %v585 = vld [vmem:[#allocation8 + $0x170] sm:$0xff]
    %v586 = vld [vmem:[#allocation8 + $0x178] sm:$0xff]
    %v587 = vld [vmem:[%s6] sm:$0x7]
    %v589 = vlaneseq
    %v590 = vshrl.u32 %v589, 7
    %v591 = vsub.s32 0, %v590
    %v592 = vrot.slane %v587, %v591
    %v593 = vlaneseq
    %v594 = vshrl.u32 %v593, 7
    %v595 = vsub.s32 1, %v594
    %v596 = vrot.slane %v587, %v595
    %v597 = vlaneseq
    %v598 = vshrl.u32 %v597, 7
    %v599 = vsub.s32 2, %v598
    %v600 = vrot.slane %v587, %v599
    %604 = vmatprep.subr.mxu0 %v540
    %605 = vmatpush1.msra.mxu0 %v539
    %606 = vmatprep.subr.mxu0 %v543
    %607 = vmatpush1.msra.mxu0 %v542
    %608 = vmatprep.subr.mxu0 %v546
    %609 = vmatpush1.msra.mxu0 %v545
    %610 = vmatprep.subr.mxu0 %v549
    %611 = vmatpush1.msra.mxu0 %v548
    %612 = vmatprep.subr.mxu0 %v552
    %613 = vmatpush1.msra.mxu0 %v551
    %614 = vmatprep.subr.mxu0 %v555
    %615 = vmatpush1.msra.mxu0 %v554
    %616 = vmatprep.subr.mxu0 %v558
    %617 = vmatpush1.msra.mxu0 %v557
    %618 = vmatprep.subr.mxu0 %v561
    %619 = vmatpush1.msra.mxu0 %v560
    %620 = vmatprep.subr.mxu0 %v564
    %621 = vmatpush1.msra.mxu0 %v563
    %622 = vmatprep.subr.mxu0 %v567
    %623 = vmatpush1.msra.mxu0 %v566
    %624 = vmatprep.subr.mxu0 %v570
    %625 = vmatpush1.msra.mxu0 %v569
    %626 = vmatprep.subr.mxu0 %v573
    %627 = vmatpush1.msra.mxu0 %v572
    %628 = vmatprep.subr.mxu0 %v576
    %629 = vmatpush1.msra.mxu0 %v575
    %630 = vmatprep.subr.mxu0 %v579
    %631 = vmatpush1.msra.mxu0 %v578
    %632 = vmatprep.subr.mxu0 %v582
    %633 = vmatpush1.msra.mxu0 %v581
    %634 = vmatprep.subr.mxu0 %v585
    %635 = vmatpush1.msra.mxu0 %v584
    %636 = vmatprep.subr.mxu0 0.0
    %637 = vmatpush1.msra.mxu0 0.0
    %638 = vmatprep.subr.mxu0 0.0
    %639 = vmatpush1.msra.mxu0 0.0
    %640 = vmatprep.subr.mxu0 0.0
    %641 = vmatpush1.msra.mxu0 0.0
    %642 = vmatprep.subr.mxu0 0.0
    %643 = vmatpush1.msra.mxu0 0.0
    %644 = vmatprep.subr.mxu0 0.0
    %645 = vmatpush1.msra.mxu0 0.0
    %646 = vmatprep.subr.mxu0 0.0
    %647 = vmatpush1.msra.mxu0 0.0
    %648 = vmatprep.subr.mxu0 0.0
    %649 = vmatpush1.msra.mxu0 0.0
    %650 = vmatprep.subr.mxu0 0.0
    %651 = vmatpush1.msra.mxu0 0.0
    %652 = vmatprep.subr.mxu0 0.0
    %653 = vmatpush1.msra.mxu0 0.0
    %654 = vmatprep.subr.mxu0 0.0
    %655 = vmatpush1.msra.mxu0 0.0
    %656 = vmatprep.subr.mxu0 0.0
    %657 = vmatpush1.msra.mxu0 0.0
    %658 = vmatprep.subr.mxu0 0.0
    %659 = vmatpush1.msra.mxu0 0.0
    %660 = vmatprep.subr.mxu0 0.0
    %661 = vmatpush1.msra.mxu0 0.0
    %662 = vmatprep.subr.mxu0 0.0
    %663 = vmatpush1.msra.mxu0 0.0
    %664 = vmatprep.subr.mxu0 0.0
    %665 = vmatpush1.msra.mxu0 0.0
    %666 = vmatprep.subr.mxu0 0.0
    %667 = vmatpush1.msra.mxu0 0.0
    %668 = vmatprep.mubr.f32.mxu0 0.0
    %669 = vmatmul.mubr.f32.gmra.mrb[0].mxu0 %v531
    %v670 = vpop.f32.mrb[0].mxu0
    %v671 = vadd.f32 %v592, %v670
    %v672 = vpop.f32.mrb[0].mxu0
    %v673 = vadd.f32 %v596, %v672
    %674 = vmatprep.mubr.f32.mxu0 0.0
    %675 = vmatmul.mubr.f32.gmra.mrb[0].mxu0 %v536
    %v676 = vpop.f32.mrb[0].mxu0
    %v677 = vadd.f32 %v592, %v676
    %v678 = vpop.f32.mrb[0].mxu0
    %v679 = vadd.f32 %v596, %v678
    %680 = vdwg.mxu0
    %681 = vmatprep.subr.mxu0 0.0
    %682 = vmatpush1.msra.mxu0 %v541
    %683 = vmatprep.subr.mxu0 0.0
    %684 = vmatpush1.msra.mxu0 %v544
    %685 = vmatprep.subr.mxu0 0.0
    %686 = vmatpush1.msra.mxu0 %v547
    %687 = vmatprep.subr.mxu0 0.0
    %688 = vmatpush1.msra.mxu0 %v550
    %689 = vmatprep.subr.mxu0 0.0
    %690 = vmatpush1.msra.mxu0 %v553
    %691 = vmatprep.subr.mxu0 0.0
    %692 = vmatpush1.msra.mxu0 %v556
    %693 = vmatprep.subr.mxu0 0.0
    %694 = vmatpush1.msra.mxu0 %v559
    %695 = vmatprep.subr.mxu0 0.0
    %696 = vmatpush1.msra.mxu0 %v562
    %697 = vmatprep.subr.mxu0 0.0
    %698 = vmatpush1.msra.mxu0 %v565
    %699 = vmatprep.subr.mxu0 0.0
    %700 = vmatpush1.msra.mxu0 %v568
    %701 = vmatprep.subr.mxu0 0.0
    %702 = vmatpush1.msra.mxu0 %v571
    %703 = vmatprep.subr.mxu0 0.0
    %704 = vmatpush1.msra.mxu0 %v574
    %705 = vmatprep.subr.mxu0 0.0
    %706 = vmatpush1.msra.mxu0 %v577
    %707 = vmatprep.subr.mxu0 0.0
    %708 = vmatpush1.msra.mxu0 %v580
    %709 = vmatprep.subr.mxu0 0.0
    %710 = vmatpush1.msra.mxu0 %v583
    %711 = vmatprep.subr.mxu0 0.0
    %712 = vmatpush1.msra.mxu0 %v586
    %713 = vmatprep.subr.mxu0 0.0
    %714 = vmatpush1.msra.mxu0 0.0
    %715 = vmatprep.subr.mxu0 0.0
    %716 = vmatpush1.msra.mxu0 0.0
    %717 = vmatprep.subr.mxu0 0.0
    %718 = vmatpush1.msra.mxu0 0.0
    %719 = vmatprep.subr.mxu0 0.0
    %720 = vmatpush1.msra.mxu0 0.0
    %721 = vmatprep.subr.mxu0 0.0
    %722 = vmatpush1.msra.mxu0 0.0
    %723 = vmatprep.subr.mxu0 0.0
    %724 = vmatpush1.msra.mxu0 0.0
    %725 = vmatprep.subr.mxu0 0.0
    %726 = vmatpush1.msra.mxu0 0.0
    %727 = vmatprep.subr.mxu0 0.0
    %728 = vmatpush1.msra.mxu0 0.0
    %729 = vmatprep.subr.mxu0 0.0
    %730 = vmatpush1.msra.mxu0 0.0
    %731 = vmatprep.subr.mxu0 0.0
    %732 = vmatpush1.msra.mxu0 0.0
    %733 = vmatprep.subr.mxu0 0.0
    %734 = vmatpush1.msra.mxu0 0.0
    %735 = vmatprep.subr.mxu0 0.0
    %736 = vmatpush1.msra.mxu0 0.0
    %737 = vmatprep.subr.mxu0 0.0
    %738 = vmatpush1.msra.mxu0 0.0
    %739 = vmatprep.subr.mxu0 0.0
    %740 = vmatpush1.msra.mxu0 0.0
    %741 = vmatprep.subr.mxu0 0.0
    %742 = vmatpush1.msra.mxu0 0.0
    %743 = vmatprep.subr.mxu0 0.0
    %744 = vmatpush1.msra.mxu0 0.0
    %745 = vmatprep.mubr.f32.mxu0 0.0
    %746 = vmatmul.mubr.f32.gmra.mrb[0].mxu0 %v531
    %v747 = vpop.f32.mrb[0].mxu0
    %v748 = vadd.f32 %v600, %v747
    %v749 = vpop.f32.mrb[0].mxu0
    %750 = vmatprep.mubr.f32.mxu0 0.0
    %751 = vmatmul.mubr.f32.gmra.mrb[0].mxu0 %v536
    %v752 = vpop.f32.mrb[0].mxu0
    %v753 = vadd.f32 %v600, %v752
    %v754 = vpop.f32.mrb[0].mxu0
    %755 = vdwg.mxu0
    %v756 = vmax.f32 %v671, 0.0
    %v757 = vmax.f32 %v673, 0.0
    %v758 = vmax.f32 %v748, 0.0
    %v759 = vmax.f32 %v677, 0.0
    %v760 = vmax.f32 %v679, 0.0
    %v761 = vmax.f32 %v753, 0.0
    %v762 = vld [vmem:[#allocation10] sm:$0xff]
    %v763 = vld [vmem:[#allocation10 + $0x8] sm:$0xff]
    %v764 = vld [vmem:[#allocation10 + $0x10] sm:$0xff]
    %v765 = vld [vmem:[#allocation10 + $0x18] sm:$0xff]
    %v766 = vld [vmem:[#allocation10 + $0x20] sm:$0xff]
    %v767 = vld [vmem:[#allocation10 + $0x28] sm:$0xff]
    %v768 = vld [vmem:[#allocation10 + $0x30] sm:$0xff]
    %v769 = vld [vmem:[#allocation10 + $0x38] sm:$0xff]
    %v770 = vld [vmem:[#allocation10 + $0x40] sm:$0xff]
    %v771 = vld [vmem:[#allocation10 + $0x48] sm:$0xff]
    %v772 = vld [vmem:[#allocation10 + $0x50] sm:$0xff]
    %v773 = vld [vmem:[#allocation10 + $0x58] sm:$0xff]
    %v774 = vld [vmem:[#allocation10 + $0x60] sm:$0xff]
    %v775 = vld [vmem:[#allocation10 + $0x68] sm:$0xff]
    %v776 = vld [vmem:[#allocation10 + $0x70] sm:$0xff]
    %v777 = vld [vmem:[#allocation10 + $0x78] sm:$0xff]
    %v778 = vld [vmem:[#allocation10 + $0x80] sm:$0xff]
    %v779 = vld [vmem:[#allocation10 + $0x88] sm:$0xff]
    %v780 = vld [vmem:[#allocation10 + $0x90] sm:$0xff]
    %v781 = vld [vmem:[#allocation10 + $0x98] sm:$0xff]
    %v782 = vld [vmem:[#allocation10 + $0xa0] sm:$0xff]
    %v783 = vld [vmem:[#allocation10 + $0xa8] sm:$0xff]
    %v784 = vld [vmem:[#allocation10 + $0xb0] sm:$0xff]
    %v785 = vld [vmem:[#allocation10 + $0xb8] sm:$0xff]
    %v786 = vld [vmem:[#allocation10 + $0xc0] sm:$0xff]
    %v787 = vld [vmem:[#allocation10 + $0xc8] sm:$0xff]
    %v788 = vld [vmem:[#allocation10 + $0xd0] sm:$0xff]
    %v789 = vld [vmem:[#allocation10 + $0xd8] sm:$0xff]
    %v790 = vld [vmem:[#allocation10 + $0xe0] sm:$0xff]
    %v791 = vld [vmem:[#allocation10 + $0xe8] sm:$0xff]
    %v792 = vld [vmem:[#allocation10 + $0xf0] sm:$0xff]
    %v793 = vld [vmem:[#allocation10 + $0xf8] sm:$0xff]
    %v794 = vld [vmem:[#allocation10 + $0x100] sm:$0xff]
    %v795 = vld [vmem:[#allocation10 + $0x108] sm:$0xff]
    %v796 = vld [vmem:[#allocation10 + $0x110] sm:$0xff]
    %v797 = vld [vmem:[#allocation10 + $0x118] sm:$0xff]
    %v798 = vld [vmem:[#allocation10 + $0x120] sm:$0xff]
    %v799 = vld [vmem:[#allocation10 + $0x128] sm:$0xff]
    %v800 = vld [vmem:[#allocation10 + $0x130] sm:$0xff]
    %v801 = vld [vmem:[#allocation10 + $0x138] sm:$0xff]
    %v802 = vld [vmem:[#allocation10 + $0x140] sm:$0xff]
    %v803 = vld [vmem:[#allocation10 + $0x148] sm:$0xff]
    %v804 = vld [vmem:[#allocation10 + $0x150] sm:$0xff]
    %v805 = vld [vmem:[#allocation10 + $0x158] sm:$0xff]
    %v806 = vld [vmem:[#allocation10 + $0x160] sm:$0xff]
    %v807 = vld [vmem:[#allocation10 + $0x168] sm:$0xff]
    %v808 = vld [vmem:[#allocation10 + $0x170] sm:$0xff]
    %v809 = vld [vmem:[#allocation10 + $0x178] sm:$0xff]
    %v810 = vld [vmem:[%s8] sm:$0x1]
    %v812 = vlaneseq
    %v813 = vshrl.u32 %v812, 7
    %v814 = vsub.s32 0, %v813
    %v815 = vrot.slane %v810, %v814
    %817 = vmatprep.subr.mxu0 0.0
    %818 = vmatpush1.msra.mxu0 %v762
    %819 = vmatprep.subr.mxu0 0.0
    %820 = vmatpush1.msra.mxu0 %v763
    %821 = vmatprep.subr.mxu0 0.0
    %822 = vmatpush1.msra.mxu0 %v764
    %823 = vmatprep.subr.mxu0 0.0
    %824 = vmatpush1.msra.mxu0 %v765
    %825 = vmatprep.subr.mxu0 0.0
    %826 = vmatpush1.msra.mxu0 %v766
    %827 = vmatprep.subr.mxu0 0.0
    %828 = vmatpush1.msra.mxu0 %v767
    %829 = vmatprep.subr.mxu0 0.0
    %830 = vmatpush1.msra.mxu0 %v768
    %831 = vmatprep.subr.mxu0 0.0
    %832 = vmatpush1.msra.mxu0 %v769
    %833 = vmatprep.subr.mxu0 0.0
    %834 = vmatpush1.msra.mxu0 %v770
    %835 = vmatprep.subr.mxu0 0.0
    %836 = vmatpush1.msra.mxu0 %v771
    %837 = vmatprep.subr.mxu0 0.0
    %838 = vmatpush1.msra.mxu0 %v772
    %839 = vmatprep.subr.mxu0 0.0
    %840 = vmatpush1.msra.mxu0 %v773
    %841 = vmatprep.subr.mxu0 0.0
    %842 = vmatpush1.msra.mxu0 %v774
    %843 = vmatprep.subr.mxu0 0.0
    %844 = vmatpush1.msra.mxu0 %v775
    %845 = vmatprep.subr.mxu0 0.0
    %846 = vmatpush1.msra.mxu0 %v776
    %847 = vmatprep.subr.mxu0 0.0
    %848 = vmatpush1.msra.mxu0 %v777
    %849 = vmatprep.subr.mxu0 0.0
    %850 = vmatpush1.msra.mxu0 %v778
    %851 = vmatprep.subr.mxu0 0.0
    %852 = vmatpush1.msra.mxu0 %v779
    %853 = vmatprep.subr.mxu0 0.0
    %854 = vmatpush1.msra.mxu0 %v780
    %855 = vmatprep.subr.mxu0 0.0
    %856 = vmatpush1.msra.mxu0 %v781
    %857 = vmatprep.subr.mxu0 0.0
    %858 = vmatpush1.msra.mxu0 %v782
    %859 = vmatprep.subr.mxu0 0.0
    %860 = vmatpush1.msra.mxu0 %v783
    %861 = vmatprep.subr.mxu0 0.0
    %862 = vmatpush1.msra.mxu0 %v784
    %863 = vmatprep.subr.mxu0 0.0
    %864 = vmatpush1.msra.mxu0 %v785
    %865 = vmatprep.subr.mxu0 0.0
    %866 = vmatpush1.msra.mxu0 %v786
    %867 = vmatprep.subr.mxu0 0.0
    %868 = vmatpush1.msra.mxu0 %v787
    %869 = vmatprep.subr.mxu0 0.0
    %870 = vmatpush1.msra.mxu0 %v788
    %871 = vmatprep.subr.mxu0 0.0
    %872 = vmatpush1.msra.mxu0 %v789
    %873 = vmatprep.subr.mxu0 0.0
    %874 = vmatpush1.msra.mxu0 %v790
    %875 = vmatprep.subr.mxu0 0.0
    %876 = vmatpush1.msra.mxu0 %v791
    %877 = vmatprep.subr.mxu0 0.0
    %878 = vmatpush1.msra.mxu0 %v792
    %879 = vmatprep.subr.mxu0 0.0
    %880 = vmatpush1.msra.mxu0 %v793
    %881 = vmatprep.mubr.f32.mxu0 %v757
    %882 = vmatmul.mubr.f32.gmra.mrb[0].mxu0 %v756
    %v883 = vpop.f32.mrb[0].mxu0
    %v884 = vadd.f32 %v815, %v883
    %v885 = vpop.f32.mrb[0].mxu0
    %886 = vmatprep.mubr.f32.mxu0 %v760
    %887 = vmatmul.mubr.f32.gmra.mrb[0].mxu0 %v759
    %v888 = vpop.f32.mrb[0].mxu0
    %v889 = vadd.f32 %v815, %v888
    %v890 = vpop.f32.mrb[0].mxu0
    %891 = vdwg.mxu0
    %892 = vmatprep.subr.mxu0 0.0
    %893 = vmatpush1.msra.mxu0 %v794
    %894 = vmatprep.subr.mxu0 0.0
    %895 = vmatpush1.msra.mxu0 %v795
    %896 = vmatprep.subr.mxu0 0.0
    %897 = vmatpush1.msra.mxu0 %v796
    %898 = vmatprep.subr.mxu0 0.0
    %899 = vmatpush1.msra.mxu0 %v797
    %900 = vmatprep.subr.mxu0 0.0
    %901 = vmatpush1.msra.mxu0 %v798
    %902 = vmatprep.subr.mxu0 0.0
    %903 = vmatpush1.msra.mxu0 %v799
    %904 = vmatprep.subr.mxu0 0.0
    %905 = vmatpush1.msra.mxu0 %v800
    %906 = vmatprep.subr.mxu0 0.0
    %907 = vmatpush1.msra.mxu0 %v801
    %908 = vmatprep.subr.mxu0 0.0
    %909 = vmatpush1.msra.mxu0 %v802
    %910 = vmatprep.subr.mxu0 0.0
    %911 = vmatpush1.msra.mxu0 %v803
    %912 = vmatprep.subr.mxu0 0.0
    %913 = vmatpush1.msra.mxu0 %v804
    %914 = vmatprep.subr.mxu0 0.0
    %915 = vmatpush1.msra.mxu0 %v805
    %916 = vmatprep.subr.mxu0 0.0
    %917 = vmatpush1.msra.mxu0 %v806
    %918 = vmatprep.subr.mxu0 0.0
    %919 = vmatpush1.msra.mxu0 %v807
    %920 = vmatprep.subr.mxu0 0.0
    %921 = vmatpush1.msra.mxu0 %v808
    %922 = vmatprep.subr.mxu0 0.0
    %923 = vmatpush1.msra.mxu0 %v809
    %924 = vmatprep.subr.mxu0 0.0
    %925 = vmatpush1.msra.mxu0 0.0
    %926 = vmatprep.subr.mxu0 0.0
    %927 = vmatpush1.msra.mxu0 0.0
    %928 = vmatprep.subr.mxu0 0.0
    %929 = vmatpush1.msra.mxu0 0.0
    %930 = vmatprep.subr.mxu0 0.0
    %931 = vmatpush1.msra.mxu0 0.0
    %932 = vmatprep.subr.mxu0 0.0
    %933 = vmatpush1.msra.mxu0 0.0
    %934 = vmatprep.subr.mxu0 0.0
    %935 = vmatpush1.msra.mxu0 0.0
    %936 = vmatprep.subr.mxu0 0.0
    %937 = vmatpush1.msra.mxu0 0.0
    %938 = vmatprep.subr.mxu0 0.0
    %939 = vmatpush1.msra.mxu0 0.0
    %940 = vmatprep.subr.mxu0 0.0
    %941 = vmatpush1.msra.mxu0 0.0
    %942 = vmatprep.subr.mxu0 0.0
    %943 = vmatpush1.msra.mxu0 0.0
    %944 = vmatprep.subr.mxu0 0.0
    %945 = vmatpush1.msra.mxu0 0.0
    %946 = vmatprep.subr.mxu0 0.0
    %947 = vmatpush1.msra.mxu0 0.0
    %948 = vmatprep.subr.mxu0 0.0
    %949 = vmatpush1.msra.mxu0 0.0
    %950 = vmatprep.subr.mxu0 0.0
    %951 = vmatpush1.msra.mxu0 0.0
    %952 = vmatprep.subr.mxu0 0.0
    %953 = vmatpush1.msra.mxu0 0.0
    %954 = vmatprep.subr.mxu0 0.0
    %955 = vmatpush1.msra.mxu0 0.0
    %956 = vmatprep.mubr.f32.mxu0 0.0
    %957 = vmatmul.mubr.f32.gmra.mrb[0].mxu0 %v758
    %v958 = vpop.f32.mrb[0].mxu0
    %v959 = vadd.f32 %v884, %v958
    %v960 = vpop.f32.mrb[0].mxu0
    %961 = vmatprep.mubr.f32.mxu0 0.0
    %962 = vmatmul.mubr.f32.gmra.mrb[0].mxu0 %v761
    %v963 = vpop.f32.mrb[0].mxu0
    %v964 = vadd.f32 %v889, %v963
    %v965 = vpop.f32.mrb[0].mxu0
    %966 = vdwg.mxu0
    %967 = vst [vmem:[#allocation11] sm:$0xff] %v959
    %968 = vst [vmem:[#allocation11 + $0x8] sm:$0xff] %v964
    // Predicated region
    $region58: #{tpu_custom_call.1} parent=1 // pred_check
      _
    $region59: #{tpu_custom_call.1} parent=1 // pred_check_branch
      %970 = sbr.rel (0) target = $region61
    $region60: #{tpu_custom_call.1} parent=1 // pred_region
      %s972 = ssub.s32 256, 256
      %973 = vsyncadd [#allocation4], %s972
      %s974 = sshll.u32 [#allocation11], 4
      %s975 = int_to_ptr.vmem [resolvable:$true] %s974
      %980 = dma.vmem_to_hbm [thread:$0]  %s975, 256, %s9, [#allocation4], 128, 128, 8
    $region61: #{tpu_custom_call.1} parent=1 // pred_fallthru
      _
    // Predicated region
    $region62: #{tpu_custom_call.1} parent=1 // pred_check
      _
    $region63: #{tpu_custom_call.1} parent=1 // pred_check_branch
      %982 = sbr.rel (0) target = $region65
    $region64: #{tpu_custom_call.1} parent=1 // pred_region
      %983 = dma.done [#allocation4], 256
    $region65: #{tpu_custom_call.1} parent=1 // pred_fallthru
      _
    %984 = vsyncpa [#allocation3], 1
    %985 = vsyncpa [#allocation6], 1
    %986 = vsyncpa [#allocation9], 1
    %987 = vsyncpa [#allocation4], 1

</llo_original>
